<compile_context>
chip_gen: v7x
topology: tpu7x:2x2x1
jax: 0.10.0
libtpu: 0.0.40
codegen_flags: <defaults>
</compile_context>

<pallas_src>
import math

import jax
import jax.numpy as jnp
from jax import lax
from jax.experimental import pallas as pl
from jax.experimental.pallas import tpu as pltpu

# ----------------------------- module config ---------------------------------
V = 1024                    # vocab size == LabelSmoothing.size (lane-dense axis)
PADDING_IDX = 0
SMOOTHING = 0.1
CONFIDENCE = 1.0 - SMOOTHING
SMOOTH_VAL = SMOOTHING / (V - 2)
# log(true_dist) only takes two finite values -> hoist td*log(td) to trace time.
TDLOGTD_CONF = CONFIDENCE * math.log(CONFIDENCE)
TDLOGTD_SMOOTH = SMOOTH_VAL * math.log(SMOOTH_VAL)

# ----------------------------- tiling config ----------------------------------
# Small demo tiles so the grid (2 row tiles x 4 vocab tiles) actually exercises
# the init / accumulate / finalize path.  For production shapes (N in the
# thousands, V ~ 32k+) raise to e.g. TILE_N=256, TILE_V=2048 (v7x, 64 MiB VMEM)
# or TILE_V=8192 on v5e/v6e (128 MiB VMEM, raise vmem_limit_bytes).
TILE_N = 8                  # rows per tile (multiple of 8 sublanes)
TILE_V = 256                # vocab per tile (multiple of 128 lanes, divides V)


# ------------------------------ kernel ----------------------------------------
def label_smoothing_kernel(x_ref, tgt_ref, td_ref, part_ref, acc_ref):
    tile_n, tile_v = x_ref.shape
    j = pl.program_id(1)                       # vocab step (reduction axis, last)
    n_j = pl.num_programs(1)

    @pl.when(j == 0)
    def _init():
        acc_ref[...] = jnp.zeros_like(acc_ref)

    x = x_ref[...]                                       # (TILE_N, TILE_V) f32 log-probs
    tgt = tgt_ref[...]                                   # (TILE_N, 1) int32 global targets
    col = lax.broadcasted_iota(jnp.int32, (tile_n, tile_v), 1)   # local class ids

    v_off = j * tile_v
    is_target = col == (tgt - v_off)                     # scatter_ positions (this tile)
    is_pad_col = col == (PADDING_IDX - v_off)            # true_dist[:, pad_idx] = 0
    is_pad_row = tgt == PADDING_IDX                      # fully masked rows
    mask_zero = jnp.logical_or(is_pad_col, is_pad_row)   # folded zeroing mask

    zero = jnp.float32(0.0)
    td = jnp.where(is_target, jnp.float32(CONFIDENCE), jnp.float32(SMOOTH_VAL))
    td = jnp.where(mask_zero, zero, td)

    # td * log(td) is one of two trace-time constants; zero-target entries give 0.
    tdlogtd = jnp.where(is_target, jnp.float32(TDLOGTD_CONF),
                        jnp.float32(TDLOGTD_SMOOTH))
    kl = jnp.where(mask_zero, zero, tdlogtd - td * x)

    td_ref[...] = td                                     # lane-dense unmasked store

    # Fold lane chunks with plain VPU adds (no per-step XLU reduction).
    folded = kl[:, 0:128]
    for k in range(1, tile_v // 128):
        folded = folded + kl[:, k * 128:(k + 1) * 128]
    acc_ref[...] += folded

    @pl.when(j == n_j - 1)
    def _finalize():
        # Single cross-lane/sublane reduce per row tile, once.
        part_ref[...] = jnp.full(part_ref.shape, jnp.sum(acc_ref[...]), jnp.float32)


# ------------------------------ wrapper ----------------------------------------
def label_smoothing(x, target):
    """x: (N, V) f32 log-probs; target: (N,) ints. Returns (loss, true_dist)."""
    n, v = x.shape
    assert v == V, f"x.shape[1]={v} must equal size={V}"
    assert V % TILE_V == 0 and TILE_V % 128 == 0 and TILE_N % 8 == 0

    # Pad rows to a TILE_N multiple with padding_idx targets: those rows are
    # zeroed by the padding logic and contribute exactly 0 to the loss.
    n_pad = -(-n // TILE_N) * TILE_N
    if n_pad != n:
        x = jnp.pad(x, ((0, n_pad - n), (0, 0)))
        target = jnp.pad(target, (0, n_pad - n), constant_values=PADDING_IDX)
    tgt2 = target.reshape(n_pad, 1).astype(jnp.int32)

    num_rt = n_pad // TILE_N
    num_vt = V // TILE_V

    td, parts = pl.pallas_call(
        label_smoothing_kernel,
        out_shape=(
            jax.ShapeDtypeStruct((n_pad, V), jnp.float32),        # true_dist
            jax.ShapeDtypeStruct((num_rt * 8, 128), jnp.float32), # per-row-tile loss
        ),
        grid_spec=pltpu.PrefetchScalarGridSpec(
            num_scalar_prefetch=0,
            grid=(num_rt, num_vt),                                # vocab (reduction) last
            in_specs=[
                pl.BlockSpec((TILE_N, TILE_V), lambda i, j: (i, j)),   # x
                pl.BlockSpec((TILE_N, 1), lambda i, j: (i, 0)),        # target (not re-DMA'd per j)
            ],
            out_specs=(
                pl.BlockSpec((TILE_N, TILE_V), lambda i, j: (i, j)),   # td (lane-dense)
                pl.BlockSpec((8, 128), lambda i, j: (i, 0)),           # per-row-tile partial
            ),
            scratch_shapes=[pltpu.VMEM((TILE_N, 128), jnp.float32)],   # kl accumulator
        ),
        compiler_params=pltpu.CompilerParams(
            dimension_semantics=("parallel", "arbitrary")),            # rows across v7x cores
    )(x, tgt2)

    loss = jnp.sum(parts.reshape(num_rt, 8 * 128)[:, 0])
    return loss, td[:n]


# --------------------------- pure-JAX reference ---------------------------------
def label_smoothing_ref(x, target):
    n, v = x.shape
    td = jnp.full((n, v), SMOOTH_VAL, dtype=jnp.float32)
    td = td.at[jnp.arange(n), target].set(jnp.float32(CONFIDENCE))
    td = td.at[:, PADDING_IDX].set(0.0)
    td = jnp.where((target == PADDING_IDX)[:, None], 0.0, td)
    kl = jnp.where(td > 0.0, td * (jnp.log(td) - x), 0.0)
    return jnp.sum(kl), td


# ------------------------------- main --------------------------------------------
if __name__ == "__main__":
    N = 16                                   # batch=2 * seq=8, flattened token rows
    key = jax.random.PRNGKey(0)
    k_logits, k_tgt = jax.random.split(key)

    logits = jax.random.normal(k_logits, (N, V), dtype=jnp.float32)
    x = jax.nn.log_softmax(logits, axis=-1)  # KLDivLoss expects log-probabilities

    target = jax.random.randint(k_tgt, (N,), 1, V, dtype=jnp.int32)
    target = target.at[3].set(PADDING_IDX).at[11].set(PADDING_IDX)  # padded rows

    loss, td = label_smoothing(x, target)
    loss = jax.block_until_ready(loss)

    loss_ref, td_ref = label_smoothing_ref(x, target)
    assert td.shape == (N, V)
    assert jnp.allclose(td, td_ref, atol=1e-6), (
        f"true_dist max abs err = {jnp.max(jnp.abs(td - td_ref))}"
    )
    assert jnp.allclose(loss, loss_ref, atol=1e-3, rtol=1e-4), (
        f"loss err: got {loss}, ref {loss_ref}"
    )

    print("KERNEL_OK")
</pallas_src>

<mosaic_0001>
module attributes {stable_mosaic.version = 11 : i64} {
  func.func @label_smoothing_kernel(%arg0: i32, %arg1: i32, %arg2: memref<8x256xf32, #tpu.memory_space<vmem>>, %arg3: memref<8x1xi32, #tpu.memory_space<vmem>>, %arg4: memref<8x256xf32, #tpu.memory_space<vmem>>, %arg5: memref<8x128xf32, #tpu.memory_space<vmem>>, %arg6: memref<8x128xf32, #tpu.memory_space<vmem>>) attributes {dimension_semantics = [#tpu.dimension_semantics<parallel>, #tpu.dimension_semantics<arbitrary>], iteration_bounds = array<i64: 2, 4>, scalar_prefetch = 0 : i64, scratch_operands = 1 : i64, tpu.core_type = #tpu.core_type<tc>, window_params = [{transform_indices = @transform_0, window_bounds = array<i64: 8, 256>}, {transform_indices = @transform_1, window_bounds = array<i64: 8, 1>}, {transform_indices = @transform_2, window_bounds = array<i64: 8, 256>}, {transform_indices = @transform_3, window_bounds = array<i64: 8, 128>}]} {
    %c0_i32 = arith.constant 0 : i32
    %0 = arith.cmpi eq, %arg1, %c0_i32 : i32
    %1 = arith.extui %0 : i1 to i32
    %c0_i32_0 = arith.constant 0 : i32
    %2 = arith.cmpi ne, %1, %c0_i32_0 : i32
    scf.if %2 {
      %cst_18 = arith.constant 0.000000e+00 : f32
      %40 = vector.broadcast %cst_18 : f32 to vector<8x128xf32>
      %c0_19 = arith.constant 0 : index
      %c0_20 = arith.constant 0 : index
      %41 = vector.load %arg6[%c0_19, %c0_20] : memref<8x128xf32, #tpu.memory_space<vmem>>, vector<8x128xf32>
      tpu.vector_store %arg6[%c0_19, %c0_20], %40 {strides = array<i32>} : memref<8x128xf32, #tpu.memory_space<vmem>>, vector<8x128xf32>,
    } else {
    }
    %c0 = arith.constant 0 : index
    %c0_1 = arith.constant 0 : index
    %3 = vector.load %arg2[%c0, %c0_1] : memref<8x256xf32, #tpu.memory_space<vmem>>, vector<8x256xf32>
    %c0_2 = arith.constant 0 : index
    %c0_3 = arith.constant 0 : index
    %4 = vector.load %arg3[%c0_2, %c0_3] : memref<8x1xi32, #tpu.memory_space<vmem>>, vector<8x1xi32>
    %5 = tpu.iota {dimensions = array<i32: 1>} : vector<8x256xi32>
    %c256_i32 = arith.constant 256 : i32
    %6 = arith.muli %arg1, %c256_i32 : i32
    %7 = vector.broadcast %6 : i32 to vector<8x1xi32>
    %8 = arith.subi %4, %7 : vector<8x1xi32>
    %9 = vector.broadcast %8 : vector<8x1xi32> to vector<8x256xi32>
    %10 = arith.cmpi eq, %5, %9 : vector<8x256xi32>
    %c0_i32_4 = arith.constant 0 : i32
    %11 = arith.subi %c0_i32_4, %6 : i32
    %12 = vector.broadcast %11 : i32 to vector<8x256xi32>
    %13 = arith.cmpi eq, %5, %12 : vector<8x256xi32>
    %c0_i32_5 = arith.constant 0 : i32
    %14 = vector.broadcast %c0_i32_5 : i32 to vector<8x1xi32>
    %15 = arith.cmpi eq, %4, %14 : vector<8x1xi32>
    %16 = vector.broadcast %15 : vector<8x1xi1> to vector<8x256xi1>
    %17 = arith.ori %13, %16 : vector<8x256xi1>
    %cst = arith.constant 0.899999976 : f32
    %cst_6 = arith.constant 9.78473617E-5 : f32
    %18 = vector.broadcast %cst : f32 to vector<8x256xf32>
    %19 = vector.broadcast %cst_6 : f32 to vector<8x256xf32>
    %20 = arith.select %10, %18, %19 : vector<8x256xi1>, vector<8x256xf32>
    %cst_7 = arith.constant 0.000000e+00 : f32
    %21 = vector.broadcast %cst_7 : f32 to vector<8x256xf32>
    %22 = arith.select %17, %21, %20 : vector<8x256xi1>, vector<8x256xf32>
    %cst_8 = arith.constant -0.0948244631 : f32
    %cst_9 = arith.constant -9.03336797E-4 : f32
    %23 = vector.broadcast %cst_8 : f32 to vector<8x256xf32>
    %24 = vector.broadcast %cst_9 : f32 to vector<8x256xf32>
    %25 = arith.select %10, %23, %24 : vector<8x256xi1>, vector<8x256xf32>
    %26 = arith.mulf %22, %3 : vector<8x256xf32>
    %27 = arith.subf %25, %26 : vector<8x256xf32>
    %cst_10 = arith.constant 0.000000e+00 : f32
    %28 = vector.broadcast %cst_10 : f32 to vector<8x256xf32>
    %29 = arith.select %17, %28, %27 : vector<8x256xi1>, vector<8x256xf32>
    %c0_11 = arith.constant 0 : index
    %c0_12 = arith.constant 0 : index
    %30 = vector.load %arg4[%c0_11, %c0_12] : memref<8x256xf32, #tpu.memory_space<vmem>>, vector<8x256xf32>
    tpu.vector_store %arg4[%c0_11, %c0_12], %22 {strides = array<i32>} : memref<8x256xf32, #tpu.memory_space<vmem>>, vector<8x256xf32>,
    %31 = vector.extract_strided_slice %29 {offsets = [0, 0], sizes = [8, 128], strides = [1, 1]} : vector<8x256xf32> to vector<8x128xf32>
    %32 = vector.extract_strided_slice %29 {offsets = [0, 128], sizes = [8, 128], strides = [1, 1]} : vector<8x256xf32> to vector<8x128xf32>
    %33 = arith.addf %31, %32 : vector<8x128xf32>
    %c0_13 = arith.constant 0 : index
    %c0_14 = arith.constant 0 : index
    %34 = vector.load %arg6[%c0_13, %c0_14] : memref<8x128xf32, #tpu.memory_space<vmem>>, vector<8x128xf32>
    %35 = arith.addf %34, %33 : vector<8x128xf32>
    %c0_15 = arith.constant 0 : index
    %c0_16 = arith.constant 0 : index
    %36 = vector.load %arg6[%c0_15, %c0_16] : memref<8x128xf32, #tpu.memory_space<vmem>>, vector<8x128xf32>
    tpu.vector_store %arg6[%c0_15, %c0_16], %35 {strides = array<i32>} : memref<8x128xf32, #tpu.memory_space<vmem>>, vector<8x128xf32>,
    %c3_i32 = arith.constant 3 : i32
    %37 = arith.cmpi eq, %arg1, %c3_i32 : i32
    %38 = arith.extui %37 : i1 to i32
    %c0_i32_17 = arith.constant 0 : i32
    %39 = arith.cmpi ne, %38, %c0_i32_17 : i32
    scf.if %39 {
      %c0_18 = arith.constant 0 : index
      %c0_19 = arith.constant 0 : index
      %40 = vector.load %arg6[%c0_18, %c0_19] : memref<8x128xf32, #tpu.memory_space<vmem>>, vector<8x128xf32>
      %41 = vector.shape_cast %40 : vector<8x128xf32> to vector<1x8x128xf32>
      %cst_20 = arith.constant dense<0.000000e+00> : vector<1xf32>
      %42 = vector.multi_reduction <add>, %41, %cst_20 [1, 2] : vector<1x8x128xf32> to vector<1xf32>
      %43 = vector.shape_cast %42 : vector<1xf32> to vector<1x1x1xf32>
      %44 = vector.extract %43[0, 0, 0] : f32 from vector<1x1x1xf32>
      %45 = vector.broadcast %44 : f32 to vector<8x128xf32>
      %c0_21 = arith.constant 0 : index
      %c0_22 = arith.constant 0 : index
      %46 = vector.load %arg5[%c0_21, %c0_22] : memref<8x128xf32, #tpu.memory_space<vmem>>, vector<8x128xf32>
      tpu.vector_store %arg5[%c0_21, %c0_22], %45 {strides = array<i32>} : memref<8x128xf32, #tpu.memory_space<vmem>>, vector<8x128xf32>,
    } else {
    }
    return
  }
  func.func @transform_0(%arg0: i32, %arg1: i32) -> (i32, i32) {
    %c0_i32 = arith.constant 0 : i32
    return %arg0, %arg1 : i32, i32
  }
  func.func @transform_1(%arg0: i32, %arg1: i32) -> (i32, i32) {
    %c0_i32 = arith.constant 0 : i32
    %c0_i32_0 = arith.constant 0 : i32
    return %arg0, %c0_i32 : i32, i32
  }
  func.func @transform_2(%arg0: i32, %arg1: i32) -> (i32, i32) {
    %c0_i32 = arith.constant 0 : i32
    return %arg0, %arg1 : i32, i32
  }
  func.func @transform_3(%arg0: i32, %arg1: i32) -> (i32, i32) {
    %c0_i32 = arith.constant 0 : i32
    %c0_i32_0 = arith.constant 0 : i32
    return %arg0, %c0_i32 : i32, i32
  }
}

</mosaic_0001>

<llo_original>
// kernel: tpu_custom_call.1
$region0: #{tpu_custom_call.1}
  #allocation0 [shape = 'u32[]', space=smem, size = 0x4, offset = 0x4, fixed_abs, tag = 'smem constant byte address 0x4 - core index']
  #allocation1 [shape = 'u32[144,128]{1,0:T(1,128)}', space=vmem, size = 0x12000, scoped, tag = 'internal scratch']
  #allocation2 [shape = 'f32[8,128]{1,0:T(8,128)}', space=vmem, size = 0x1000, scoped, tag = 'scratch operand']
  %s0 = inlined_call_operand.hbm [shape: f32[16,1024], index: 0, kind: input, shape index: {}]
  %s1 = inlined_call_operand.vmem [shape: s32[16,1], index: 1, kind: input, shape index: {}]
  %s2 = inlined_call_operand.hbm [shape: f32[16,1024], index: 2, kind: output, shape index: {0}]
  %s3 = inlined_call_operand.hbm [shape: f32[16,128], index: 3, kind: output, shape index: {1}]
  %4 = xla_tuple %s2, %s3
  %s5 = sld [smem:[#allocation0]]
  $region61: #{tpu_custom_call.1} parent=0
    _
  %s7 = ssub.s32 1, %s5
  %s8 = scalar_select 0, %s7, %s5
  $region1: #{tpu_custom_call.1} parent=0
    #allocation3 [shape = 'u8[16384]{0}', space=vmem, size = 0x4000, scoped, tag = 'input window, operand 0']
    #allocation4 [shape = 's32[2]{0}', space=sflag, size = 0x8, scoped, tag = 'scoped memory for tpu_custom_call.1']
    #allocation5 [shape = 's32[2]{0}', space=sflag, size = 0x8, scoped, tag = 'scoped memory for tpu_custom_call.1']
    #allocation6 [shape = 'u8[16384]{0}', space=vmem, size = 0x4000, scoped, tag = 'output window, operand 0']
    #allocation7 [shape = 'u8[8192]{0}', space=vmem, size = 0x2000, scoped, tag = 'output window, operand 1']
    #allocation8 [shape = 's32[2]{0}', space=sflag, size = 0x8, scoped, tag = 'scoped memory for tpu_custom_call.1']
    %9 = vsyncpa [#allocation4], 0
    %s10 = scalar_lea.sflag [#allocation4], 1
    %11 = vsyncpa %s10, 0
    %12 = vsyncpa [#allocation5], 0
    %s13 = scalar_lea.sflag [#allocation5], 1
    %14 = vsyncpa %s13, 0
    %15 = vsyncpa [#allocation8], 0
    %s16 = scalar_lea.sflag [#allocation8], 1
    %17 = vsyncpa %s16, 0
    loop: start=0, step=1, limit=10
    $region2: #{tpu_custom_call.1} parent=1 // loop_pre_header
      _
    $region3: #{tpu_custom_call.1} parent=1 // loop_header
      %s19 = sphi 0, %s23
      %p20 = scmp.ge.s32.totalorder %s19, 10
      %s26 = sphi 0, %s38
      %s27 = sphi 0, %s34
      %s28 = sphi 0, %s26
      %s29 = sphi 0, %s27
      %s30 = sphi 0, %s28
      %s31 = sphi 0, %s29
      %s43 = sphi 0, %s45
      %s46 = sphi 0, %s43
      %s47 = sphi 0, %s46
      %s63 = sphi 0, %s47
      %s69 = sphi 0, %s71
      %s72 = sphi 0, %s69
      %s73 = sphi 0, %s72
      %s89 = sphi 0, %s73
      %s97 = sphi 0, %s99
      %s100 = sphi 0, %s97
      %s101 = sphi 0, %s100
      %s117 = sphi 0, %s101
      %s123 = sphi 0, %s125
      %s126 = sphi 0, %s123
      %s127 = sphi 0, %s126
      %s143 = sphi 0, %s127
    $region4: #{tpu_custom_call.1} parent=1 // loop_header_branch
      %22 = sbr.rel (%p20) target = $region8
    $region5: #{tpu_custom_call.1} parent=1 // loop_body
      %s24 = ssub.s32 %s19, 1
      %s25 = ssub.s32 %s19, 2
      %s32 = sadd.s32 1, %s27
      %p33 = scmp.ge.s32.totalorder %s32, 4
      %s34 = scalar_select %p33, 0, %s32
      %s35 = sadd.s32 1, %s26
      %s36 = scalar_select %p33, %s35, %s26
      %p37 = scmp.ge.s32.totalorder %s36, 2
      %s38 = scalar_select %p37, 0, %s36
      %s39 = ssub.s32 %s26, %s38
      %s40 = ssub.s32 %s27, %s34
      %s41 = sor.u32 %s39, %s40
      %p42 = scmp.eq.s32.totalorder %s41, 0
      %s44 = sadd.s32 %s43, 1
      %s45 = scalar_select %p42, %s43, %s44
      %p48 = pneg %p42
      %p49 = scmp.eq.s32.totalorder %s19, 7
      %p50 = por %p48, %p49
      %p51 = scmp.ne.s32.totalorder %s43, %s46
      %p52 = scmp.eq.s32.totalorder %s19, 0
      %p53 = por %p51, %p52
      %p54 = scmp.ne.s32.totalorder %s43, %s46
      %p55 = scmp.eq.s32.totalorder %s24, 7
      %p56 = por %p54, %p55
      %p57 = scmp.ne.s32.totalorder %s46, %s47
      %p58 = scmp.eq.s32.totalorder %s24, 0
      %p59 = por %p57, %p58
      %p60 = scmp.ne.s32.totalorder %s46, %s47
      %p61 = scmp.eq.s32.totalorder %s25, 7
      %p62 = por %p60, %p61
      %p64 = scmp.ne.s32.totalorder %s47, %s63
      %p65 = scmp.eq.s32.totalorder %s25, 0
      %p66 = por %p64, %p65
      %s67 = ssub.s32 %s26, %s38
      %p68 = scmp.eq.s32.totalorder %s67, 0
      %s70 = sadd.s32 %s69, 1
      %s71 = scalar_select %p68, %s69, %s70
      %p74 = pneg %p68
      %p75 = scmp.eq.s32.totalorder %s19, 7
      %p76 = por %p74, %p75
      %p77 = scmp.ne.s32.totalorder %s69, %s72
      %p78 = scmp.eq.s32.totalorder %s19, 0
      %p79 = por %p77, %p78
      %p80 = scmp.ne.s32.totalorder %s69, %s72
      %p81 = scmp.eq.s32.totalorder %s24, 7
      %p82 = por %p80, %p81
      %p83 = scmp.ne.s32.totalorder %s72, %s73
      %p84 = scmp.eq.s32.totalorder %s24, 0
      %p85 = por %p83, %p84
      %p86 = scmp.ne.s32.totalorder %s72, %s73
      %p87 = scmp.eq.s32.totalorder %s25, 7
      %p88 = por %p86, %p87
      %p90 = scmp.ne.s32.totalorder %s73, %s89
      %p91 = scmp.eq.s32.totalorder %s25, 0
      %p92 = por %p90, %p91
      %s93 = ssub.s32 %s26, %s38
      %s94 = ssub.s32 %s27, %s34
      %s95 = sor.u32 %s93, %s94
      %p96 = scmp.eq.s32.totalorder %s95, 0
      %s98 = sadd.s32 %s97, 1
      %s99 = scalar_select %p96, %s97, %s98
      %p102 = pneg %p96
      %p103 = scmp.eq.s32.totalorder %s19, 7
      %p104 = por %p102, %p103
      %p105 = scmp.ne.s32.totalorder %s97, %s100
      %p106 = scmp.eq.s32.totalorder %s19, 0
      %p107 = por %p105, %p106
      %p108 = scmp.ne.s32.totalorder %s97, %s100
      %p109 = scmp.eq.s32.totalorder %s24, 7
      %p110 = por %p108, %p109
      %p111 = scmp.ne.s32.totalorder %s100, %s101
      %p112 = scmp.eq.s32.totalorder %s24, 0
      %p113 = por %p111, %p112
      %p114 = scmp.ne.s32.totalorder %s100, %s101
      %p115 = scmp.eq.s32.totalorder %s25, 7
      %p116 = por %p114, %p115
      %p118 = scmp.ne.s32.totalorder %s101, %s117
      %p119 = scmp.eq.s32.totalorder %s25, 0
      %p120 = por %p118, %p119
      %s121 = ssub.s32 %s26, %s38
      %p122 = scmp.eq.s32.totalorder %s121, 0
      %s124 = sadd.s32 %s123, 1
      %s125 = scalar_select %p122, %s123, %s124
      %p128 = pneg %p122
      %p129 = scmp.eq.s32.totalorder %s19, 7
      %p130 = por %p128, %p129
      %p131 = scmp.ne.s32.totalorder %s123, %s126
      %p132 = scmp.eq.s32.totalorder %s19, 0
      %p133 = por %p131, %p132
      %p134 = scmp.ne.s32.totalorder %s123, %s126
      %p135 = scmp.eq.s32.totalorder %s24, 7
      %p136 = por %p134, %p135
      %p137 = scmp.ne.s32.totalorder %s126, %s127
      %p138 = scmp.eq.s32.totalorder %s24, 0
      %p139 = por %p137, %p138
      %p140 = scmp.ne.s32.totalorder %s126, %s127
      %p141 = scmp.eq.s32.totalorder %s25, 7
      %p142 = por %p140, %p141
      %p144 = scmp.ne.s32.totalorder %s127, %s143
      %p145 = scmp.eq.s32.totalorder %s25, 0
      %p146 = por %p144, %p145
      %p147 = scmp.le.s32.totalorder 1, %s19
      %p148 = scmp.lt.s32.totalorder %s19, 9
      %p149 = pnand %p147, %p148
      %p150 = pneg %p149
      // Predicated region
      $region9: #{tpu_custom_call.1} parent=5 // pred_check
        _
      $region10: #{tpu_custom_call.1} parent=5 // pred_check_branch
        %152 = sbr.rel (%p149) target = $region12
      $region11: #{tpu_custom_call.1} parent=5 // pred_region
        %s153 = ssub.s32 %s19, 1
      $region12: #{tpu_custom_call.1} parent=5 // pred_fallthru
        _
      %p154 = scmp.lt.s32.totalorder %s19, 8
      // Predicated region
      $region13: #{tpu_custom_call.1} parent=5 // pred_check
        %p155 = pneg %p154
      $region14: #{tpu_custom_call.1} parent=5 // pred_check_branch
        %157 = sbr.rel (%p155) target = $region16
      $region15: #{tpu_custom_call.1} parent=5 // pred_region
        // Predicated region
        $region17: #{tpu_custom_call.1} parent=15 // pred_check
          %p158 = pneg %p53
        $region18: #{tpu_custom_call.1} parent=15 // pred_check_branch
          %160 = sbr.rel (%p158) target = $region20
        $region19: #{tpu_custom_call.1} parent=15 // pred_region
          %s161 = sand.u32 %s43, 1
          %s162 = scalar_lea.sflag [#allocation4], %s161
          %s163 = sand.u32 %s43, 1
          %s164 = smul.addr %s163, 16
          %s165 = scalar_lea.vmem [#allocation3], %s164
          %s166 = smul.u32 2, %s27
          %s168 = ssub.s32 256, 256
          %169 = vsyncadd %s162, %s168
          %s170 = smul.addr %s26, 8
          %s171 = sadd.s32 %s166, %s170
          %s172 = smul.addr %s171, 128
          %s173 = scalar_lea.hbm %s0, %s172
          %s175 = sshll.u32 %s165, 4
          %s176 = int_to_ptr.vmem [resolvable:$true] %s175
          %178 = dma.hbm_to_vmem [thread:$0]  %s173, 256, %s176, %s162
        $region20: #{tpu_custom_call.1} parent=15 // pred_fallthru
          _
        // Predicated region
        $region21: #{tpu_custom_call.1} parent=15 // pred_check
          %p179 = pneg %p79
        $region22: #{tpu_custom_call.1} parent=15 // pred_check_branch
          %181 = sbr.rel (%p179) target = $region24
        $region23: #{tpu_custom_call.1} parent=15 // pred_region
          %p182 = scmp.lt.s32.totalorder %s26, 1
          %s183 = scalar_select %p182, %s26, 1
          %s184 = smul.addr %s183, 8
          %s185 = scalar_lea.vmem %s1, %s184
        $region24: #{tpu_custom_call.1} parent=15 // pred_fallthru
          _
      $region16: #{tpu_custom_call.1} parent=5 // pred_fallthru
        _
      %p186 = scmp.le.s32.totalorder 1, %s19
      %p187 = scmp.lt.s32.totalorder %s19, 9
      %p188 = pnand %p186, %p187
      %p189 = pneg %p188
      // Predicated region
      $region25: #{tpu_custom_call.1} parent=5 // pred_check
        _
      $region26: #{tpu_custom_call.1} parent=5 // pred_check_branch
        %191 = sbr.rel (%p188) target = $region28
      $region27: #{tpu_custom_call.1} parent=5 // pred_region
        %s192 = ssub.s32 %s19, 1
        %s193 = sand.u32 %s46, 1
        %s194 = scalar_lea.sflag [#allocation4], %s193
        %s195 = sand.u32 %s46, 1
        %s196 = smul.addr %s195, 16
        %s197 = scalar_lea.vmem [#allocation3], %s196
        // Predicated region
        $region29: #{tpu_custom_call.1} parent=27 // pred_check
          %p198 = pneg %p59
        $region30: #{tpu_custom_call.1} parent=27 // pred_check_branch
          %200 = sbr.rel (%p198) target = $region32
        $region31: #{tpu_custom_call.1} parent=27 // pred_region
          %201 = dma.done %s194, 256
        $region32: #{tpu_custom_call.1} parent=27 // pred_fallthru
          _
        %s202 = sand.u32 %s46, 1
        %s203 = scalar_lea.sflag [#allocation4], %s202
        %s204 = sand.u32 %s46, 1
        %s205 = smul.addr %s204, 16
        %s206 = scalar_lea.vmem [#allocation3], %s205
        %p207 = pneg %p59
        %p208 = pneg %p56
        %p209 = scmp.lt.s32.totalorder %s28, 1
        %s210 = scalar_select %p209, %s28, 1
        %s211 = smul.addr %s210, 8
        %s212 = scalar_lea.vmem %s1, %s211
        %p213 = pneg %p85
        %p214 = pneg %p82
        %p215 = pneg %p113
        %p216 = pneg %p110
        %s217 = sand.u32 %s100, 1
        %s218 = scalar_lea.sflag [#allocation5], %s217
        %s219 = sand.u32 %s100, 1
        %s220 = smul.addr %s219, 16
        %s221 = scalar_lea.vmem [#allocation6], %s220
        %p222 = pneg %p139
        %p223 = pneg %p136
        %s224 = sand.u32 %s126, 1
        %s225 = scalar_lea.sflag [#allocation8], %s224
        %s226 = sand.u32 %s126, 1
        %s227 = smul.addr %s226, 8
        %s228 = scalar_lea.vmem [#allocation7], %s227
        %s229 = smul.u32 2, %s29
        %p230 = scmp.lt.s32.totalorder %s28, 1
        %s231 = scalar_select %p230, %s28, 1
        %s232 = smul.addr %s231, 8
        %s233 = scalar_lea.vmem %s1, %s232
        %s234 = smul.u32 2, %s29
        %p235 = scmp.eq.s32.totalorder %s29, 0
        // Predicated region
        $region33: #{tpu_custom_call.1} parent=27 // pred_check
          %p236 = pneg %p235
        $region34: #{tpu_custom_call.1} parent=27 // pred_check_branch
          %238 = sbr.rel (%p236) target = $region36
        $region35: #{tpu_custom_call.1} parent=27 // pred_region
          %239 = vst [vmem:[#allocation2] sm:$0xff] 0.0
        $region36: #{tpu_custom_call.1} parent=27 // pred_fallthru
          _
        %v240 = vld [vmem:[%s197] sm:$0xff]
        %v241 = vld [vmem:[%s197 + $0x8] sm:$0xff]
        %v242 = vld [vmem:[%s233] sm:$0xff]
        %v243 = vlaneseq
        %v244 = vand.u32 %v243, 127
        %v245 = vadd.s32 %v244, 128
        %s246 = smul.u32 %s29, 256
        %v247 = vstv %s246
        %v248 = vsub.s32 %v242, %v247
        %249 = vset.pattern.permute.xlu0 0
        %250 = vperm.xlu0 %249, %v248
        %v251 = vpop.permute.xlu0 %250
        %vm252 = vcmp.eq.s32.totalorder %v244, %v251
        %vm253 = vcmp.eq.s32.totalorder %v245, %v251
        %s254 = ssub.s32 0, %s246
        %v255 = vstv %s254
        %vm256 = vcmp.eq.s32.totalorder %v244, %v255
        %vm257 = vcmp.eq.s32.totalorder %v245, %v255
        %vm258 = vcmp.eq.s32.totalorder %v242, 0
        %v259 = vsel %vm258, 1, 0
        %260 = vset.pattern.permute.xlu0 0
        %261 = vperm.xlu0 %260, %v259
        %v262 = vpop.permute.xlu0 %261
        %vm263 = vcmp.eq.s32.totalorder %v262, 1
        %vm264 = vmor %vm256, %vm263
        %vm265 = vmor %vm257, %vm263
        %v266 = vsel %vm252, 0.9, 9.784736e-05
        %v267 = vsel %vm253, 0.9, 9.784736e-05
        %v268 = vsel %vm264, 0.0, %v266
        %v269 = vsel %vm265, 0.0, %v267
        %v270 = vsel %vm252, -0.09482446, -0.0009033368
        %v271 = vsel %vm253, -0.09482446, -0.0009033368
        %v272 = vmul.f32 %v268, %v240
        %v273 = vmul.f32 %v269, %v241
        %v274 = vsub.f32 %v270, %v272
        %v275 = vsub.f32 %v271, %v273
        %v276 = vsel %vm264, 0.0, %v274
        %v277 = vsel %vm265, 0.0, %v275
        %278 = vst [vmem:[%s221] sm:$0xff] %v268
        %279 = vst [vmem:[%s221 + $0x8] sm:$0xff] %v269
        %v280 = vadd.f32 %v276, %v277
        %v281 = vld [vmem:[#allocation2] sm:$0xff]
        %v282 = vadd.f32 %v281, %v280
        %283 = vst [vmem:[#allocation2] sm:$0xff] %v282
        %p284 = scmp.eq.s32.totalorder %s29, 3
        // Predicated region
        $region37: #{tpu_custom_call.1} parent=27 // pred_check
          %p285 = pneg %p284
        $region38: #{tpu_custom_call.1} parent=27 // pred_check_branch
          %287 = sbr.rel (%p285) target = $region40
        $region39: #{tpu_custom_call.1} parent=27 // pred_region
          %v288 = vld [vmem:[#allocation2] sm:$0xff]
          %289 = vadd.xlane.f32.xlu0 %v288
          %v290 = vpop.xlane.xlu0 %289
          %v291 = vrot.slane %v290, 4
          %v292 = vadd.f32 %v290, %v291
          %v293 = vrot.slane %v292, 2
          %v294 = vadd.f32 %v292, %v293
          %v295 = vrot.slane %v294, 1
          %v296 = vadd.f32 %v294, %v295
          %s297 = vtos %v296
          %v298 = vstv %s297
          %299 = vst [vmem:[%s228] sm:$0xff] %v298
        $region40: #{tpu_custom_call.1} parent=27 // pred_fallthru
          _
        %s300 = sand.u32 %s100, 1
        %s301 = scalar_lea.sflag [#allocation5], %s300
        %s302 = sand.u32 %s100, 1
        %s303 = smul.addr %s302, 16
        %s304 = scalar_lea.vmem [#allocation6], %s303
        %s305 = sand.u32 %s126, 1
        %s306 = scalar_lea.sflag [#allocation8], %s305
        %s307 = sand.u32 %s126, 1
        %s308 = smul.addr %s307, 8
        %s309 = scalar_lea.vmem [#allocation7], %s308
        // Predicated region
        $region41: #{tpu_custom_call.1} parent=27 // pred_check
          %p310 = pneg %p110
        $region42: #{tpu_custom_call.1} parent=27 // pred_check_branch
          %312 = sbr.rel (%p310) target = $region44
        $region43: #{tpu_custom_call.1} parent=27 // pred_region
          %s313 = smul.u32 2, %s29
          %s315 = ssub.s32 256, 256
          %316 = vsyncadd %s301, %s315
          %s317 = smul.addr %s28, 8
          %s318 = sadd.s32 %s313, %s317
          %s319 = smul.addr %s318, 128
          %s320 = scalar_lea.hbm %s2, %s319
          %s322 = sshll.u32 %s304, 4
          %s323 = int_to_ptr.vmem [resolvable:$true] %s322
          %325 = dma.vmem_to_hbm [thread:$0]  %s323, 256, %s320, %s301
        $region44: #{tpu_custom_call.1} parent=27 // pred_fallthru
          _
        // Predicated region
        $region45: #{tpu_custom_call.1} parent=27 // pred_check
          %p326 = pneg %p136
        $region46: #{tpu_custom_call.1} parent=27 // pred_check_branch
          %328 = sbr.rel (%p326) target = $region48
        $region47: #{tpu_custom_call.1} parent=27 // pred_region
          %s330 = ssub.s32 128, 128
          %331 = vsyncadd %s306, %s330
          %s332 = smul.addr %s28, 128
          %s333 = scalar_lea.hbm %s3, %s332
          %s335 = sshll.u32 %s309, 4
          %s336 = int_to_ptr.vmem [resolvable:$true] %s335
          %338 = dma.vmem_to_hbm [thread:$0]  %s336, 128, %s333, %s306
        $region48: #{tpu_custom_call.1} parent=27 // pred_fallthru
          _
      $region28: #{tpu_custom_call.1} parent=5 // pred_fallthru
        _
      %p339 = scmp.le.s32.totalorder 2, %s19
      // Predicated region
      $region49: #{tpu_custom_call.1} parent=5 // pred_check
        %p340 = pneg %p339
      $region50: #{tpu_custom_call.1} parent=5 // pred_check_branch
        %342 = sbr.rel (%p340) target = $region52
      $region51: #{tpu_custom_call.1} parent=5 // pred_region
        %s343 = ssub.s32 %s19, 2
        // Predicated region
        $region53: #{tpu_custom_call.1} parent=51 // pred_check
          %p344 = pneg %p116
        $region54: #{tpu_custom_call.1} parent=51 // pred_check_branch
          %346 = sbr.rel (%p344) target = $region56
        $region55: #{tpu_custom_call.1} parent=51 // pred_region
          %s347 = sand.u32 %s101, 1
          %s348 = scalar_lea.sflag [#allocation5], %s347
          %s349 = sand.u32 %s101, 1
          %s350 = smul.addr %s349, 16
          %s351 = scalar_lea.vmem [#allocation6], %s350
          %352 = dma.done %s348, 256
        $region56: #{tpu_custom_call.1} parent=51 // pred_fallthru
          _
        // Predicated region
        $region57: #{tpu_custom_call.1} parent=51 // pred_check
          %p353 = pneg %p142
        $region58: #{tpu_custom_call.1} parent=51 // pred_check_branch
          %355 = sbr.rel (%p353) target = $region60
        $region59: #{tpu_custom_call.1} parent=51 // pred_region
          %s356 = sand.u32 %s127, 1
          %s357 = scalar_lea.sflag [#allocation8], %s356
          %s358 = sand.u32 %s127, 1
          %s359 = smul.addr %s358, 8
          %s360 = scalar_lea.vmem [#allocation7], %s359
          %361 = dma.done %s357, 128
        $region60: #{tpu_custom_call.1} parent=51 // pred_fallthru
          _
      $region52: #{tpu_custom_call.1} parent=5 // pred_fallthru
        _
    $region6: #{tpu_custom_call.1} parent=1 // loop_footer
      %s23 = sadd.s32 1, %s19
    $region7: #{tpu_custom_call.1} parent=1 // loop_footer_branch
      %18 = sbr.rel target = $region3
    $region8: #{tpu_custom_call.1} parent=1 // loop_exit
      _
    %362 = vsyncpa [#allocation4], 1
    %s363 = scalar_lea.sflag [#allocation4], 1
    %364 = vsyncpa %s363, 1
    %365 = vsyncpa [#allocation5], 1
    %s366 = scalar_lea.sflag [#allocation5], 1
    %367 = vsyncpa %s366, 1
    %368 = vsyncpa [#allocation8], 1
    %s369 = scalar_lea.sflag [#allocation8], 1
    %370 = vsyncpa %s369, 1

</llo_original>
